<compile_context>
chip_gen: v5e
topology: v5e:2x2
jax: 0.10.0
libtpu: 0.0.40
codegen_flags: <defaults>
</compile_context>

<pallas_src>
import functools
import math

import jax
import jax.numpy as jnp
from jax.experimental import pallas as pl
from jax.experimental.pallas import tpu as pltpu

LN_EPS = 1e-5  # nn.LayerNorm default eps


# ----------------------------------------------------------------------------
# in-kernel helpers (all f32)
# ----------------------------------------------------------------------------
def _layer_norm(x, gamma, beta):
    mu = jnp.mean(x, axis=-1, keepdims=True)
    var = jnp.mean((x - mu) ** 2, axis=-1, keepdims=True)
    inv = jax.lax.rsqrt(var + LN_EPS)
    return (x - mu) * inv * gamma + beta


def _gelu(x):
    # tanh approximation (EUP-friendly, matches the reference BERT GELU).
    # TODO(synk): use exact erf GELU if bit-parity with nn.GELU is required.
    c = math.sqrt(2.0 / math.pi)
    return 0.5 * x * (1.0 + jnp.tanh(c * (x + 0.044715 * x * x * x)))


# ----------------------------------------------------------------------------
# kernel 1: embedding sum + LayerNorm
# ----------------------------------------------------------------------------
def embed_kernel(tok_ref, pos_ref, seg_ref, g_ref, b_ref, o_ref):
    x = tok_ref[0] + pos_ref[...] + seg_ref[0]          # (S, H) f32
    o_ref[0] = _layer_norm(x, g_ref[...], b_ref[...])


def embedding_forward(tok_e, pos_e, seg_e, gamma, beta):
    B, S, H = tok_e.shape
    return pl.pallas_call(
        embed_kernel,
        out_shape=jax.ShapeDtypeStruct((B, S, H), jnp.float32),
        grid=(B,),
        in_specs=[
            pl.BlockSpec((1, S, H), lambda b: (b, 0, 0)),
            pl.BlockSpec((S, H), lambda b: (0, 0)),
            pl.BlockSpec((1, S, H), lambda b: (b, 0, 0)),
            pl.BlockSpec((1, H), lambda b: (0, 0)),
            pl.BlockSpec((1, H), lambda b: (0, 0)),
        ],
        out_specs=pl.BlockSpec((1, S, H), lambda b: (b, 0, 0)),
        compiler_params=pltpu.CompilerParams(dimension_semantics=("parallel",)),
    )(tok_e, pos_e, seg_e, gamma, beta)


# ----------------------------------------------------------------------------
# kernel 2: fused transformer encoder stack
#   grid = (batch, layer); hidden state carried across layers in VMEM scratch.
# ----------------------------------------------------------------------------
def encoder_stack_kernel(x_ref, mask_ref,
                         wq_ref, bq_ref, wk_ref, bk_ref, wv_ref, bv_ref,
                         wo_ref, bo_ref, g1_ref, be1_ref,
                         w1_ref, bf1_ref, w2_ref, bf2_ref, g2_ref, be2_ref,
                         o_ref, h_scr, *, num_heads):
    l = pl.program_id(1)

    # layer 0 reads the embedding output; later layers read the carried state
    @pl.when(l == 0)
    def _():
        h_scr[...] = x_ref[0]

    x = h_scr[...]                                      # (S, H) f32
    S, H = x.shape
    dh = H // num_heads
    scale = 1.0 / math.sqrt(dh)

    # additive key mask: 0 where attend, -1e9 where masked
    add_mask = (mask_ref[0] - 1.0) * 1e9                 # (1, S) f32

    # QKV projections: bf16 operands on the MXU, f32 accumulation
    xb = x.astype(jnp.bfloat16)
    q = jnp.dot(xb, wq_ref[0], preferred_element_type=jnp.float32) + bq_ref[0]
    k = jnp.dot(xb, wk_ref[0], preferred_element_type=jnp.float32) + bk_ref[0]
    v = jnp.dot(xb, wv_ref[0], preferred_element_type=jnp.float32) + bv_ref[0]

    # multi-head attention: per-head scores/softmax (f32 stats), then heads are
    # concatenated so the output projection is a single full-K (S,H)@(H,H) matmul.
    ctx_heads = []
    for h in range(num_heads):
        sl = slice(h * dh, (h + 1) * dh)
        qh = q[:, sl].astype(jnp.bfloat16)
        kh = k[:, sl].astype(jnp.bfloat16)
        vh = v[:, sl].astype(jnp.bfloat16)
        scores = jax.lax.dot_general(
            qh, kh, (((1,), (1,)), ((), ())),
            preferred_element_type=jnp.float32) * scale + add_mask   # (S, S) f32
        m = jnp.max(scores, axis=-1, keepdims=True)
        p = jnp.exp(scores - m)
        p = p * pl.reciprocal(jnp.sum(p, axis=-1, keepdims=True), approx=True)
        ctx_heads.append(jnp.dot(p.astype(jnp.bfloat16), vh,
                                 preferred_element_type=jnp.float32))  # (S, dh)
    ctx = jnp.concatenate(ctx_heads, axis=-1)            # (S, H) f32
    attn = jnp.dot(ctx.astype(jnp.bfloat16), wo_ref[0],
                   preferred_element_type=jnp.float32) + bo_ref[0]

    x1 = _layer_norm(x + attn, g1_ref[0], be1_ref[0])

    # FFN: bf16 matmuls, f32 GELU / bias / residual
    hdn = _gelu(jnp.dot(x1.astype(jnp.bfloat16), w1_ref[0],
                        preferred_element_type=jnp.float32) + bf1_ref[0])
    ffn = jnp.dot(hdn.astype(jnp.bfloat16), w2_ref[0],
                  preferred_element_type=jnp.float32) + bf2_ref[0]

    y = _layer_norm(x1 + ffn, g2_ref[0], be2_ref[0])
    h_scr[...] = y

    @pl.when(l == pl.num_programs(1) - 1)
    def _():
        o_ref[0] = y


def encoder_stack_forward(x, mask, stacked, num_heads):
    B, S, H = x.shape
    L = stacked["wq"].shape[0]
    F4 = stacked["w1"].shape[-1]

    def wspec(*shape):
        # per-layer parameter slab, streamed (double-buffered) over the layer axis
        return pl.BlockSpec((1,) + shape, lambda b, l: (l, 0, 0))

    in_specs = [
        pl.BlockSpec((1, S, H), lambda b, l: (b, 0, 0)),  # embedding output
        pl.BlockSpec((1, 1, S), lambda b, l: (b, 0, 0)),  # attention mask
        wspec(H, H), wspec(1, H),                         # Wq, bq
        wspec(H, H), wspec(1, H),                         # Wk, bk
        wspec(H, H), wspec(1, H),                         # Wv, bv
        wspec(H, H), wspec(1, H),                         # Wo, bo
        wspec(1, H), wspec(1, H),                         # LN1 gamma, beta
        wspec(H, F4), wspec(1, F4),                       # FFN W1, b1
        wspec(F4, H), wspec(1, H),                        # FFN W2, b2
        wspec(1, H), wspec(1, H),                         # LN2 gamma, beta
    ]
    return pl.pallas_call(
        functools.partial(encoder_stack_kernel, num_heads=num_heads),
        out_shape=jax.ShapeDtypeStruct((B, S, H), jnp.float32),
        grid=(B, L),
        in_specs=in_specs,
        out_specs=pl.BlockSpec((1, S, H), lambda b, l: (b, 0, 0)),
        scratch_shapes=[pltpu.VMEM((S, H), jnp.float32)],   # hidden-state carry
        compiler_params=pltpu.CompilerParams(
            dimension_semantics=("parallel", "arbitrary"),
            # Explicit scoped-VMEM budget: big enough for BERT-base bf16 weight
            # slabs (double-buffered) + activations, but <= v7x's 64 MiB physical.
            vmem_limit_bytes=64 * 1024 * 1024),
    )(x, mask,
      stacked["wq"], stacked["bq"], stacked["wk"], stacked["bk"],
      stacked["wv"], stacked["bv"], stacked["wo"], stacked["bo"],
      stacked["ln1_g"], stacked["ln1_b"], stacked["w1"], stacked["b1"],
      stacked["w2"], stacked["b2"], stacked["ln2_g"], stacked["ln2_b"])


# ----------------------------------------------------------------------------
# parameter init (deterministic, BERT-style N(0, 0.02)); matmul weights in bf16
# ----------------------------------------------------------------------------
def init_bert_params(key, vocab_size, pad_id, max_seq_len, n_segment,
                     hidden, num_layers):
    def nrm(k, shape, dtype=jnp.float32):
        return (0.02 * jax.random.normal(k, shape, dtype=jnp.float32)).astype(dtype)

    keys = jax.random.split(key, 4 + num_layers)
    tok_table = nrm(keys[0], (vocab_size, hidden))
    tok_table = tok_table.at[pad_id].set(0.0)            # padding_idx => zero row
    emb = {
        "tok": tok_table,
        "pos": nrm(keys[1], (max_seq_len, hidden)),
        "seg": nrm(keys[2], (n_segment, hidden)),
        "ln_g": jnp.ones((1, hidden), jnp.float32),
        "ln_b": jnp.zeros((1, hidden), jnp.float32),
    }

    wdt = jnp.bfloat16   # MXU matmul weights; biases / LN params stay f32
    layers = []
    for i in range(num_layers):
        lk = jax.random.split(keys[4 + i], 6)
        layers.append({
            "wq": nrm(lk[0], (hidden, hidden), wdt),
            "bq": jnp.zeros((1, hidden), jnp.float32),
            "wk": nrm(lk[1], (hidden, hidden), wdt),
            "bk": jnp.zeros((1, hidden), jnp.float32),
            "wv": nrm(lk[2], (hidden, hidden), wdt),
            "bv": jnp.zeros((1, hidden), jnp.float32),
            "wo": nrm(lk[3], (hidden, hidden), wdt),
            "bo": jnp.zeros((1, hidden), jnp.float32),
            "ln1_g": jnp.ones((1, hidden), jnp.float32),
            "ln1_b": jnp.zeros((1, hidden), jnp.float32),
            "w1": nrm(lk[4], (hidden, 4 * hidden), wdt),
            "b1": jnp.zeros((1, 4 * hidden), jnp.float32),
            "w2": nrm(lk[5], (4 * hidden, hidden), wdt),
            "b2": jnp.zeros((1, hidden), jnp.float32),
            "ln2_g": jnp.ones((1, hidden), jnp.float32),
            "ln2_b": jnp.zeros((1, hidden), jnp.float32),
        })
    # stack per-layer params into (L, ...) so the single fused pallas_call can
    # stream them with an index_map over the layer grid axis.
    stacked = {k: jnp.stack([lp[k] for lp in layers]) for k in layers[0]}
    return emb, stacked


# ----------------------------------------------------------------------------
# full BERT forward
# ----------------------------------------------------------------------------
def bert_forward(params, x_ids, segment_label, attention_mask=None, *, num_heads):
    emb, stacked = params
    B, S = x_ids.shape

    # embedding table gathers (JAX glue)
    # TODO(synk): in-kernel gather via PrefetchScalarGridSpec would avoid
    #             materializing these (B,S,H) gather outputs in HBM.
    tok_e = jnp.take(emb["tok"], x_ids, axis=0)          # (B, S, H)
    seg_e = jnp.take(emb["seg"], segment_label, axis=0)  # (B, S, H)
    pos_e = emb["pos"][:S]                               # (S, H)

    h = embedding_forward(tok_e, pos_e, seg_e, emb["ln_g"], emb["ln_b"])
    # TODO(synk): dropout (drop_prob) is a no-op at inference and is omitted.

    if attention_mask is None:
        attention_mask = jnp.ones((B, 1, S), jnp.float32)
    attention_mask = attention_mask.astype(jnp.float32)

    return encoder_stack_forward(h, attention_mask, stacked, num_heads)


# ----------------------------------------------------------------------------
if __name__ == "__main__":
    # small config consistent with the module
    vocab_size, pad_id = 50, 0
    max_seq_len, n_segment = 16, 2
    hidden_size, num_hidden_layers, num_attention_heads = 32, 2, 4
    B, S = 2, 8

    key = jax.random.PRNGKey(0)
    k_param, k_ids, k_seg = jax.random.split(key, 3)

    params = init_bert_params(k_param, vocab_size, pad_id, max_seq_len,
                              n_segment, hidden_size, num_hidden_layers)

    x_ids = jax.random.randint(k_ids, (B, S), 1, vocab_size, dtype=jnp.int32)
    segment_label = jax.random.randint(k_seg, (B, S), 0, n_segment, dtype=jnp.int32)

    # mask: all tokens valid except the last two keys of example 1
    attention_mask = jnp.ones((B, 1, S), jnp.float32)
    attention_mask = attention_mask.at[1, 0, -2:].set(0.0)

    out = bert_forward(params, x_ids, segment_label, attention_mask,
                       num_heads=num_attention_heads)
    out = jax.block_until_ready(out)

    assert out.shape == (B, S, hidden_size) and out.dtype == jnp.float32
    assert bool(jnp.all(jnp.isfinite(out)))
    print("KERNEL_OK")
</pallas_src>

<mosaic_0001>
module attributes {stable_mosaic.version = 11 : i64} {
  func.func @embed_kernel(%arg0: i32, %arg1: memref<1x8x32xf32, #tpu.memory_space<vmem>>, %arg2: memref<8x32xf32, #tpu.memory_space<vmem>>, %arg3: memref<1x8x32xf32, #tpu.memory_space<vmem>>, %arg4: memref<1x32xf32, #tpu.memory_space<vmem>>, %arg5: memref<1x32xf32, #tpu.memory_space<vmem>>, %arg6: memref<1x8x32xf32, #tpu.memory_space<vmem>>) attributes {dimension_semantics = [#tpu.dimension_semantics<parallel>], iteration_bounds = array<i64: 2>, scalar_prefetch = 0 : i64, scratch_operands = 0 : i64, tpu.core_type = #tpu.core_type<tc>, window_params = [{transform_indices = @transform_0, window_bounds = array<i64: 1, 8, 32>}, {pipeline_mode = #tpu.pipeline_mode<synchronous>, transform_indices = @transform_1, window_bounds = array<i64: 8, 32>}, {transform_indices = @transform_2, window_bounds = array<i64: 1, 8, 32>}, {pipeline_mode = #tpu.pipeline_mode<synchronous>, transform_indices = @transform_3, window_bounds = array<i64: 1, 32>}, {pipeline_mode = #tpu.pipeline_mode<synchronous>, transform_indices = @transform_4, window_bounds = array<i64: 1, 32>}, {transform_indices = @transform_5, window_bounds = array<i64: 1, 8, 32>}]} {
    %c0 = arith.constant 0 : index
    %c0_0 = arith.constant 0 : index
    %c0_1 = arith.constant 0 : index
    %0 = vector.load %arg1[%c0, %c0_0, %c0_1] : memref<1x8x32xf32, #tpu.memory_space<vmem>>, vector<1x8x32xf32>
    %1 = vector.shape_cast %0 : vector<1x8x32xf32> to vector<8x32xf32>
    %c0_2 = arith.constant 0 : index
    %c0_3 = arith.constant 0 : index
    %2 = vector.load %arg2[%c0_2, %c0_3] : memref<8x32xf32, #tpu.memory_space<vmem>>, vector<8x32xf32>
    %3 = arith.addf %1, %2 : vector<8x32xf32>
    %c0_4 = arith.constant 0 : index
    %c0_5 = arith.constant 0 : index
    %c0_6 = arith.constant 0 : index
    %4 = vector.load %arg3[%c0_4, %c0_5, %c0_6] : memref<1x8x32xf32, #tpu.memory_space<vmem>>, vector<1x8x32xf32>
    %5 = vector.shape_cast %4 : vector<1x8x32xf32> to vector<8x32xf32>
    %6 = arith.addf %3, %5 : vector<8x32xf32>
    %c0_7 = arith.constant 0 : index
    %c0_8 = arith.constant 0 : index
    %7 = vector.load %arg4[%c0_7, %c0_8] : memref<1x32xf32, #tpu.memory_space<vmem>>, vector<1x32xf32>
    %c0_9 = arith.constant 0 : index
    %c0_10 = arith.constant 0 : index
    %8 = vector.load %arg5[%c0_9, %c0_10] : memref<1x32xf32, #tpu.memory_space<vmem>>, vector<1x32xf32>
    %cst = arith.constant dense<0.000000e+00> : vector<8xf32>
    %9 = vector.multi_reduction <add>, %6, %cst [1] : vector<8x32xf32> to vector<8xf32>
    %10 = vector.shape_cast %9 : vector<8xf32> to vector<8x1xf32>
    %cst_11 = arith.constant 3.200000e+01 : f32
    %11 = vector.broadcast %cst_11 : f32 to vector<8x1xf32>
    %12 = arith.divf %10, %11 : vector<8x1xf32>
    %13 = vector.broadcast %12 : vector<8x1xf32> to vector<8x32xf32>
    %14 = arith.subf %6, %13 : vector<8x32xf32>
    %15 = arith.mulf %14, %14 : vector<8x32xf32>
    %cst_12 = arith.constant dense<0.000000e+00> : vector<8xf32>
    %16 = vector.multi_reduction <add>, %15, %cst_12 [1] : vector<8x32xf32> to vector<8xf32>
    %17 = vector.shape_cast %16 : vector<8xf32> to vector<8x1xf32>
    %cst_13 = arith.constant 3.200000e+01 : f32
    %18 = vector.broadcast %cst_13 : f32 to vector<8x1xf32>
    %19 = arith.divf %17, %18 : vector<8x1xf32>
    %cst_14 = arith.constant 9.99999974E-6 : f32
    %20 = vector.broadcast %cst_14 : f32 to vector<8x1xf32>
    %21 = arith.addf %19, %20 : vector<8x1xf32>
    %22 = math.rsqrt %21 : vector<8x1xf32>
    %23 = vector.broadcast %12 : vector<8x1xf32> to vector<8x32xf32>
    %24 = arith.subf %6, %23 : vector<8x32xf32>
    %25 = vector.broadcast %22 : vector<8x1xf32> to vector<8x32xf32>
    %26 = arith.mulf %24, %25 : vector<8x32xf32>
    %27 = vector.broadcast %7 : vector<1x32xf32> to vector<8x32xf32>
    %28 = arith.mulf %26, %27 : vector<8x32xf32>
    %29 = vector.broadcast %8 : vector<1x32xf32> to vector<8x32xf32>
    %30 = arith.addf %28, %29 : vector<8x32xf32>
    %c0_15 = arith.constant 0 : index
    %c0_16 = arith.constant 0 : index
    %c0_17 = arith.constant 0 : index
    %31 = vector.load %arg6[%c0_15, %c0_16, %c0_17] : memref<1x8x32xf32, #tpu.memory_space<vmem>>, vector<1x8x32xf32>
    %32 = vector.shape_cast %31 : vector<1x8x32xf32> to vector<8x32xf32>
    %33 = vector.shape_cast %30 : vector<8x32xf32> to vector<1x8x32xf32>
    tpu.vector_store %arg6[%c0_15, %c0_16, %c0_17], %33 {strides = array<i32>} : memref<1x8x32xf32, #tpu.memory_space<vmem>>, vector<1x8x32xf32>,
    return
  }
  func.func @transform_0(%arg0: i32) -> (i32, i32, i32) {
    %c0_i32 = arith.constant 0 : i32
    %c0_i32_0 = arith.constant 0 : i32
    %c0_i32_1 = arith.constant 0 : i32
    return %arg0, %c0_i32, %c0_i32_0 : i32, i32, i32
  }
  func.func @transform_1(%arg0: i32) -> (i32, i32) {
    %c0_i32 = arith.constant 0 : i32
    %c0_i32_0 = arith.constant 0 : i32
    %c0_i32_1 = arith.constant 0 : i32
    return %c0_i32, %c0_i32_0 : i32, i32
  }
  func.func @transform_2(%arg0: i32) -> (i32, i32, i32) {
    %c0_i32 = arith.constant 0 : i32
    %c0_i32_0 = arith.constant 0 : i32
    %c0_i32_1 = arith.constant 0 : i32
    return %arg0, %c0_i32, %c0_i32_0 : i32, i32, i32
  }
  func.func @transform_3(%arg0: i32) -> (i32, i32) {
    %c0_i32 = arith.constant 0 : i32
    %c0_i32_0 = arith.constant 0 : i32
    %c0_i32_1 = arith.constant 0 : i32
    return %c0_i32, %c0_i32_0 : i32, i32
  }
  func.func @transform_4(%arg0: i32) -> (i32, i32) {
    %c0_i32 = arith.constant 0 : i32
    %c0_i32_0 = arith.constant 0 : i32
    %c0_i32_1 = arith.constant 0 : i32
    return %c0_i32, %c0_i32_0 : i32, i32
  }
  func.func @transform_5(%arg0: i32) -> (i32, i32, i32) {
    %c0_i32 = arith.constant 0 : i32
    %c0_i32_0 = arith.constant 0 : i32
    %c0_i32_1 = arith.constant 0 : i32
    return %arg0, %c0_i32, %c0_i32_0 : i32, i32, i32
  }
}

</mosaic_0001>

<llo_original>
// kernel: tpu_custom_call.1
$region0: #{tpu_custom_call.1}
  #allocation0 [shape = 'u32[]', space=smem, size = 0x4, offset = 0x4, fixed_abs, tag = 'smem constant byte address 0x4 - core index']
  #allocation1 [shape = 'u32[72,128]{1,0:T(1,128)}', space=vmem, size = 0x9000, scoped, tag = 'internal scratch']
  %s0 = inlined_call_operand.hbm [shape: f32[2,8,32], index: 0, kind: input, shape index: {}]
  %s1 = inlined_call_operand.hbm [shape: f32[8,32], index: 1, kind: input, shape index: {}]
  %s2 = inlined_call_operand.hbm [shape: f32[2,8,32], index: 2, kind: input, shape index: {}]
  %s3 = inlined_call_operand.vmem [shape: f32[1,32], index: 3, kind: input, shape index: {}]
  %s4 = inlined_call_operand.vmem [shape: f32[1,32], index: 4, kind: input, shape index: {}]
  %s5 = inlined_call_operand.hbm [shape: f32[2,8,32], index: 5, kind: output, shape index: {}]
  %s6 = sld [smem:[#allocation0]]
  $region65: #{tpu_custom_call.1} parent=0
    _
  %s8 = ssub.s32 1, %s6
  %s9 = scalar_select 0, %s8, %s6
  $region1: #{tpu_custom_call.1} parent=0
    #allocation2 [shape = 'u8[8192]{0}', space=vmem, size = 0x2000, scoped, tag = 'input window, operand 0']
    #allocation3 [shape = 's32[2]{0}', space=sflag, size = 0x8, scoped, tag = 'scoped memory for tpu_custom_call.1']
    #allocation4 [shape = 's32[2]{0}', space=sflag, size = 0x8, scoped, tag = 'scoped memory for tpu_custom_call.1']
    #allocation5 [shape = 'u8[4096]{0}', space=vmem, size = 0x1000, scoped, tag = 'input window, operand 1, single buffered']
    #allocation6 [shape = 's32[1]{0}', space=sflag, size = 0x4, scoped, tag = 'scoped memory for tpu_custom_call.1']
    #allocation7 [shape = 'u8[8192]{0}', space=vmem, size = 0x2000, scoped, tag = 'input window, operand 2']
    #allocation8 [shape = 'u8[8192]{0}', space=vmem, size = 0x2000, scoped, tag = 'output window, operand 0']
    %10 = vsyncpa [#allocation3], 0
    %s11 = scalar_lea.sflag [#allocation3], 1
    %12 = vsyncpa %s11, 0
    %13 = vsyncpa [#allocation6], 0
    %14 = vsyncpa [#allocation4], 0
    %s15 = scalar_lea.sflag [#allocation4], 1
    %16 = vsyncpa %s15, 0
    loop: start=0, step=1, limit=4
    $region2: #{tpu_custom_call.1} parent=1 // loop_pre_header
      _
    $region3: #{tpu_custom_call.1} parent=1 // loop_header
      %s18 = sphi 0, %s22
      %p19 = scmp.ge.s32.totalorder %s18, 4
      %s28 = sphi 0, %s30
      %s31 = sphi 0, %s28
      %s32 = sphi 0, %s31
      %s48 = sphi 0, %s32
      %s52 = sphi 0, %s52
      %s54 = sphi 0, %s52
      %s55 = sphi 0, %s54
      %s69 = sphi 0, %s55
      %s75 = sphi 0, %s77
      %s78 = sphi 0, %s75
      %s79 = sphi 0, %s78
      %s95 = sphi 0, %s79
      %s99 = sphi 0, %s99
      %s101 = sphi 0, %s99
      %s102 = sphi 0, %s101
      %s116 = sphi 0, %s102
      %s120 = sphi 0, %s120
      %s122 = sphi 0, %s120
      %s123 = sphi 0, %s122
      %s137 = sphi 0, %s123
      %s143 = sphi 0, %s145
      %s146 = sphi 0, %s143
      %s147 = sphi 0, %s146
      %s163 = sphi 0, %s147
    $region4: #{tpu_custom_call.1} parent=1 // loop_header_branch
      %21 = sbr.rel (%p19) target = $region8
    $region5: #{tpu_custom_call.1} parent=1 // loop_body
      %s23 = ssub.s32 %s18, 1
      %s24 = ssub.s32 %s18, 2
      %s25 = sadd.s32 %s18, 1
      %s26 = ssub.s32 %s18, %s25
      %p27 = scmp.eq.s32.totalorder %s26, 0
      %s29 = sadd.s32 %s28, 1
      %s30 = scalar_select %p27, %s28, %s29
      %p33 = pneg %p27
      %p34 = scmp.eq.s32.totalorder %s18, 1
      %p35 = por %p33, %p34
      %p36 = scmp.ne.s32.totalorder %s28, %s31
      %p37 = scmp.eq.s32.totalorder %s18, 0
      %p38 = por %p36, %p37
      %p39 = scmp.ne.s32.totalorder %s28, %s31
      %p40 = scmp.eq.s32.totalorder %s23, 1
      %p41 = por %p39, %p40
      %p42 = scmp.ne.s32.totalorder %s31, %s32
      %p43 = scmp.eq.s32.totalorder %s23, 0
      %p44 = por %p42, %p43
      %p45 = scmp.ne.s32.totalorder %s31, %s32
      %p46 = scmp.eq.s32.totalorder %s24, 1
      %p47 = por %p45, %p46
      %p49 = scmp.ne.s32.totalorder %s32, %s48
      %p50 = scmp.eq.s32.totalorder %s24, 0
      %p51 = por %p49, %p50
      %s53 = sadd.s32 %s52, 1
      %p56 = scmp.eq.s32.totalorder %s18, 1
      %p57 = scmp.ne.s32.totalorder %s52, %s54
      %p58 = scmp.eq.s32.totalorder %s18, 0
      %p59 = por %p57, %p58
      %p60 = scmp.ne.s32.totalorder %s52, %s54
      %p61 = scmp.eq.s32.totalorder %s23, 1
      %p62 = por %p60, %p61
      %p63 = scmp.ne.s32.totalorder %s54, %s55
      %p64 = scmp.eq.s32.totalorder %s23, 0
      %p65 = por %p63, %p64
      %p66 = scmp.ne.s32.totalorder %s54, %s55
      %p67 = scmp.eq.s32.totalorder %s24, 1
      %p68 = por %p66, %p67
      %p70 = scmp.ne.s32.totalorder %s55, %s69
      %p71 = scmp.eq.s32.totalorder %s24, 0
      %p72 = por %p70, %p71
      %s73 = ssub.s32 %s18, %s25
      %p74 = scmp.eq.s32.totalorder %s73, 0
      %s76 = sadd.s32 %s75, 1
      %s77 = scalar_select %p74, %s75, %s76
      %p80 = pneg %p74
      %p81 = scmp.eq.s32.totalorder %s18, 1
      %p82 = por %p80, %p81
      %p83 = scmp.ne.s32.totalorder %s75, %s78
      %p84 = scmp.eq.s32.totalorder %s18, 0
      %p85 = por %p83, %p84
      %p86 = scmp.ne.s32.totalorder %s75, %s78
      %p87 = scmp.eq.s32.totalorder %s23, 1
      %p88 = por %p86, %p87
      %p89 = scmp.ne.s32.totalorder %s78, %s79
      %p90 = scmp.eq.s32.totalorder %s23, 0
      %p91 = por %p89, %p90
      %p92 = scmp.ne.s32.totalorder %s78, %s79
      %p93 = scmp.eq.s32.totalorder %s24, 1
      %p94 = por %p92, %p93
      %p96 = scmp.ne.s32.totalorder %s79, %s95
      %p97 = scmp.eq.s32.totalorder %s24, 0
      %p98 = por %p96, %p97
      %s100 = sadd.s32 %s99, 1
      %p103 = scmp.eq.s32.totalorder %s18, 1
      %p104 = scmp.ne.s32.totalorder %s99, %s101
      %p105 = scmp.eq.s32.totalorder %s18, 0
      %p106 = por %p104, %p105
      %p107 = scmp.ne.s32.totalorder %s99, %s101
      %p108 = scmp.eq.s32.totalorder %s23, 1
      %p109 = por %p107, %p108
      %p110 = scmp.ne.s32.totalorder %s101, %s102
      %p111 = scmp.eq.s32.totalorder %s23, 0
      %p112 = por %p110, %p111
      %p113 = scmp.ne.s32.totalorder %s101, %s102
      %p114 = scmp.eq.s32.totalorder %s24, 1
      %p115 = por %p113, %p114
      %p117 = scmp.ne.s32.totalorder %s102, %s116
      %p118 = scmp.eq.s32.totalorder %s24, 0
      %p119 = por %p117, %p118
      %s121 = sadd.s32 %s120, 1
      %p124 = scmp.eq.s32.totalorder %s18, 1
      %p125 = scmp.ne.s32.totalorder %s120, %s122
      %p126 = scmp.eq.s32.totalorder %s18, 0
      %p127 = por %p125, %p126
      %p128 = scmp.ne.s32.totalorder %s120, %s122
      %p129 = scmp.eq.s32.totalorder %s23, 1
      %p130 = por %p128, %p129
      %p131 = scmp.ne.s32.totalorder %s122, %s123
      %p132 = scmp.eq.s32.totalorder %s23, 0
      %p133 = por %p131, %p132
      %p134 = scmp.ne.s32.totalorder %s122, %s123
      %p135 = scmp.eq.s32.totalorder %s24, 1
      %p136 = por %p134, %p135
      %p138 = scmp.ne.s32.totalorder %s123, %s137
      %p139 = scmp.eq.s32.totalorder %s24, 0
      %p140 = por %p138, %p139
      %s141 = ssub.s32 %s18, %s25
      %p142 = scmp.eq.s32.totalorder %s141, 0
      %s144 = sadd.s32 %s143, 1
      %s145 = scalar_select %p142, %s143, %s144
      %p148 = pneg %p142
      %p149 = scmp.eq.s32.totalorder %s18, 1
      %p150 = por %p148, %p149
      %p151 = scmp.ne.s32.totalorder %s143, %s146
      %p152 = scmp.eq.s32.totalorder %s18, 0
      %p153 = por %p151, %p152
      %p154 = scmp.ne.s32.totalorder %s143, %s146
      %p155 = scmp.eq.s32.totalorder %s23, 1
      %p156 = por %p154, %p155
      %p157 = scmp.ne.s32.totalorder %s146, %s147
      %p158 = scmp.eq.s32.totalorder %s23, 0
      %p159 = por %p157, %p158
      %p160 = scmp.ne.s32.totalorder %s146, %s147
      %p161 = scmp.eq.s32.totalorder %s24, 1
      %p162 = por %p160, %p161
      %p164 = scmp.ne.s32.totalorder %s147, %s163
      %p165 = scmp.eq.s32.totalorder %s24, 0
      %p166 = por %p164, %p165
      %p167 = scmp.le.s32.totalorder 1, %s18
      %p168 = scmp.lt.s32.totalorder %s18, 3
      %p169 = pnand %p167, %p168
      %p170 = pneg %p169
      // Predicated region
      $region9: #{tpu_custom_call.1} parent=5 // pred_check
        _
      $region10: #{tpu_custom_call.1} parent=5 // pred_check_branch
        %172 = sbr.rel (%p169) target = $region12
      $region11: #{tpu_custom_call.1} parent=5 // pred_region
        %s173 = ssub.s32 %s18, 1
        // Predicated region
        $region13: #{tpu_custom_call.1} parent=11 // pred_check
          %p174 = pneg %p65
        $region14: #{tpu_custom_call.1} parent=11 // pred_check_branch
          %176 = sbr.rel (%p174) target = $region16
        $region15: #{tpu_custom_call.1} parent=11 // pred_region
          %178 = vsyncadd [#allocation6], 0
          %s180 = sshll.u32 %s1, 4
          %s181 = int_to_ptr.hbm [resolvable:$true] %s180
          %s182 = sshll.u32 [#allocation5], 4
          %s183 = int_to_ptr.vmem [resolvable:$true] %s182
          %185 = dma.hbm_to_vmem [thread:$0]  %s181, 128, %s183, [#allocation6]
        $region16: #{tpu_custom_call.1} parent=11 // pred_fallthru
          _
        // Predicated region
        $region17: #{tpu_custom_call.1} parent=11 // pred_check
          %p186 = pneg %p112
        $region18: #{tpu_custom_call.1} parent=11 // pred_check_branch
          %188 = sbr.rel (%p186) target = $region20
        $region19: #{tpu_custom_call.1} parent=11 // pred_region
          _
        $region20: #{tpu_custom_call.1} parent=11 // pred_fallthru
          _
        // Predicated region
        $region21: #{tpu_custom_call.1} parent=11 // pred_check
          %p189 = pneg %p133
        $region22: #{tpu_custom_call.1} parent=11 // pred_check_branch
          %191 = sbr.rel (%p189) target = $region24
        $region23: #{tpu_custom_call.1} parent=11 // pred_region
          _
        $region24: #{tpu_custom_call.1} parent=11 // pred_fallthru
          _
      $region12: #{tpu_custom_call.1} parent=5 // pred_fallthru
        _
      %p192 = scmp.lt.s32.totalorder %s18, 2
      // Predicated region
      $region25: #{tpu_custom_call.1} parent=5 // pred_check
        %p193 = pneg %p192
      $region26: #{tpu_custom_call.1} parent=5 // pred_check_branch
        %195 = sbr.rel (%p193) target = $region28
      $region27: #{tpu_custom_call.1} parent=5 // pred_region
        // Predicated region
        $region29: #{tpu_custom_call.1} parent=27 // pred_check
          %p196 = pneg %p38
        $region30: #{tpu_custom_call.1} parent=27 // pred_check_branch
          %198 = sbr.rel (%p196) target = $region32
        $region31: #{tpu_custom_call.1} parent=27 // pred_region
          %s199 = sand.u32 %s18, 1
          %s200 = scalar_lea.sflag [#allocation3], %s199
          %s201 = sand.u32 %s28, 1
          %s202 = smul.addr %s201, 8
          %s203 = scalar_lea.vmem [#allocation2], %s202
          %205 = vsyncadd %s200, 0
          %s206 = smul.addr %s18, 8
          %s207 = scalar_lea.hbm %s0, %s206
          %s209 = sshll.u32 %s207, 4
          %s210 = int_to_ptr.hbm [resolvable:$true] %s209
          %s211 = sshll.u32 %s203, 4
          %s212 = int_to_ptr.vmem [resolvable:$true] %s211
          %214 = dma.hbm_to_vmem [thread:$0]  %s210, 128, %s212, %s200
        $region32: #{tpu_custom_call.1} parent=27 // pred_fallthru
          _
        // Predicated region
        $region33: #{tpu_custom_call.1} parent=27 // pred_check
          %p215 = pneg %p85
        $region34: #{tpu_custom_call.1} parent=27 // pred_check_branch
          %217 = sbr.rel (%p215) target = $region36
        $region35: #{tpu_custom_call.1} parent=27 // pred_region
          %s218 = sand.u32 %s18, 1
          %s219 = scalar_lea.sflag [#allocation3], %s218
          %s220 = sand.u32 %s75, 1
          %s221 = smul.addr %s220, 8
          %s222 = scalar_lea.vmem [#allocation7], %s221
          %224 = vsyncadd %s219, 0
          %s225 = smul.addr %s18, 8
          %s226 = scalar_lea.hbm %s2, %s225
          %s228 = sshll.u32 %s226, 4
          %s229 = int_to_ptr.hbm [resolvable:$true] %s228
          %s230 = sshll.u32 %s222, 4
          %s231 = int_to_ptr.vmem [resolvable:$true] %s230
          %233 = dma.hbm_to_vmem [thread:$0]  %s229, 128, %s231, %s219
        $region36: #{tpu_custom_call.1} parent=27 // pred_fallthru
          _
      $region28: #{tpu_custom_call.1} parent=5 // pred_fallthru
        _
      %p234 = scmp.le.s32.totalorder 1, %s18
      %p235 = scmp.lt.s32.totalorder %s18, 3
      %p236 = pnand %p234, %p235
      %p237 = pneg %p236
      // Predicated region
      $region37: #{tpu_custom_call.1} parent=5 // pred_check
        _
      $region38: #{tpu_custom_call.1} parent=5 // pred_check_branch
        %239 = sbr.rel (%p236) target = $region40
      $region39: #{tpu_custom_call.1} parent=5 // pred_region
        %s240 = ssub.s32 %s18, 1
        %s241 = sand.u32 %s23, 1
        %s242 = scalar_lea.sflag [#allocation3], %s241
        %s243 = sand.u32 %s31, 1
        %s244 = smul.addr %s243, 8
        %s245 = scalar_lea.vmem [#allocation2], %s244
        // Predicated region
        $region41: #{tpu_custom_call.1} parent=39 // pred_check
          %p246 = pneg %p44
        $region42: #{tpu_custom_call.1} parent=39 // pred_check_branch
          %248 = sbr.rel (%p246) target = $region44
        $region43: #{tpu_custom_call.1} parent=39 // pred_region
          %250 = dma.done %s242, 128
        $region44: #{tpu_custom_call.1} parent=39 // pred_fallthru
          _
        // Predicated region
        $region45: #{tpu_custom_call.1} parent=39 // pred_check
          %p251 = pneg %p65
        $region46: #{tpu_custom_call.1} parent=39 // pred_check_branch
          %253 = sbr.rel (%p251) target = $region48
        $region47: #{tpu_custom_call.1} parent=39 // pred_region
          %255 = dma.done [#allocation6], 128
        $region48: #{tpu_custom_call.1} parent=39 // pred_fallthru
          _
        %s256 = sand.u32 %s23, 1
        %s257 = scalar_lea.sflag [#allocation3], %s256
        %s258 = sand.u32 %s78, 1
        %s259 = smul.addr %s258, 8
        %s260 = scalar_lea.vmem [#allocation7], %s259
        // Predicated region
        $region49: #{tpu_custom_call.1} parent=39 // pred_check
          %p261 = pneg %p91
        $region50: #{tpu_custom_call.1} parent=39 // pred_check_branch
          %263 = sbr.rel (%p261) target = $region52
        $region51: #{tpu_custom_call.1} parent=39 // pred_region
          %265 = dma.done %s257, 128
        $region52: #{tpu_custom_call.1} parent=39 // pred_fallthru
          _
        %s266 = sand.u32 %s23, 1
        %s267 = scalar_lea.sflag [#allocation3], %s266
        %s268 = sand.u32 %s31, 1
        %s269 = smul.addr %s268, 8
        %s270 = scalar_lea.vmem [#allocation2], %s269
        %p271 = pneg %p44
        %p272 = pneg %p41
        %p273 = pneg %p65
        %p274 = pneg %p62
        %s275 = sand.u32 %s23, 1
        %s276 = scalar_lea.sflag [#allocation3], %s275
        %s277 = sand.u32 %s78, 1
        %s278 = smul.addr %s277, 8
        %s279 = scalar_lea.vmem [#allocation7], %s278
        %p280 = pneg %p91
        %p281 = pneg %p88
        %p282 = pneg %p112
        %p283 = pneg %p109
        %p284 = pneg %p133
        %p285 = pneg %p130
        %p286 = pneg %p159
        %p287 = pneg %p156
        %s288 = sand.u32 %s146, 1
        %s289 = scalar_lea.sflag [#allocation4], %s288
        %s290 = sand.u32 %s146, 1
        %s291 = smul.addr %s290, 8
        %s292 = scalar_lea.vmem [#allocation8], %s291
        %v293 = vld [vmem:[%s245] sm:$0xff]
        %v294 = vld [vmem:[#allocation5] sm:$0xff]
        %v295 = vadd.f32 %v293, %v294
        %v296 = vld [vmem:[%s260] sm:$0xff]
        %v297 = vadd.f32 %v295, %v296
        %v298 = vld [vmem:[%s3] sm:$0x1]
        %v299 = vld [vmem:[%s4] sm:$0x1]
        %vm300 = vcmask 261120
        %v301 = vsel %vm300, %v297, 0.0
        %302 = vadd.xlane.f32.xlu0 %v301
        %v303 = vpop.xlane.xlu0 %302
        %v304 = vrcp.pop 32.0
        %v305 = vmul.f32 32.0, %v304
        %v306 = vsub.f32 1.0, %v305
        %v307 = vmul.f32 %v304, %v306
        %v308 = vadd.f32 %v304, %v307
        %vm309 = vweird.f32 %v304
        %v310 = vsel %vm309, %v304, %v308
        %v311 = vmul.f32 %v303, %v310
        %v312 = vsub.f32 %v297, %v311
        %v313 = vmul.f32 %v312, %v312
        %v314 = vsel %vm300, %v313, 0.0
        %315 = vadd.xlane.f32.xlu0 %v314
        %v316 = vpop.xlane.xlu0 %315
        %v317 = vmul.f32 %v316, %v310
        %v318 = vadd.f32 %v317, 1e-05
        %v319 = vrsqrt.pop %v318
        %v320 = vmul.f32 %v319, %v318
        %v321 = vmul.f32 %v320, %v319
        %v322 = vmul.f32 0.5, %v321
        %v323 = vsub.f32 1.5, %v322
        %v324 = vmul.f32 %v319, %v323
        %vm325 = vweird.f32 %v318
        %vm326 = vweird.f32 %v319
        %vm327 = vmor %vm325, %vm326
        %v328 = vsel %vm327, %v319, %v324
        %v329 = vmul.f32 %v312, %v328
        %v331 = vperm.slane %v298, 0
        %v333 = vmul.f32 %v329, %v331
        %v335 = vperm.slane %v299, 0
        %v337 = vadd.f32 %v333, %v335
        %338 = vst.msk [vmem:[%s292] sm:$0xff] %vm300, %v337
        %s339 = sand.u32 %s146, 1
        %s340 = scalar_lea.sflag [#allocation4], %s339
        %s341 = sand.u32 %s146, 1
        %s342 = smul.addr %s341, 8
        %s343 = scalar_lea.vmem [#allocation8], %s342
        // Predicated region
        $region53: #{tpu_custom_call.1} parent=39 // pred_check
          %p344 = pneg %p156
        $region54: #{tpu_custom_call.1} parent=39 // pred_check_branch
          %346 = sbr.rel (%p344) target = $region56
        $region55: #{tpu_custom_call.1} parent=39 // pred_region
          %348 = vsyncadd %s340, 0
          %s349 = smul.addr %s23, 8
          %s350 = scalar_lea.hbm %s5, %s349
          %s352 = sshll.u32 %s343, 4
          %s353 = int_to_ptr.vmem [resolvable:$true] %s352
          %s354 = sshll.u32 %s350, 4
          %s355 = int_to_ptr.hbm [resolvable:$true] %s354
          %357 = dma.vmem_to_hbm [thread:$0]  %s353, 128, %s355, %s340
        $region56: #{tpu_custom_call.1} parent=39 // pred_fallthru
          _
      $region40: #{tpu_custom_call.1} parent=5 // pred_fallthru
        _
      %p358 = scmp.le.s32.totalorder 2, %s18
      // Predicated region
      $region57: #{tpu_custom_call.1} parent=5 // pred_check
        %p359 = pneg %p358
      $region58: #{tpu_custom_call.1} parent=5 // pred_check_branch
        %361 = sbr.rel (%p359) target = $region60
      $region59: #{tpu_custom_call.1} parent=5 // pred_region
        %s362 = ssub.s32 %s18, 2
        // Predicated region
        $region61: #{tpu_custom_call.1} parent=59 // pred_check
          %p363 = pneg %p162
        $region62: #{tpu_custom_call.1} parent=59 // pred_check_branch
          %365 = sbr.rel (%p363) target = $region64
        $region63: #{tpu_custom_call.1} parent=59 // pred_region
          %s366 = sand.u32 %s147, 1
          %s367 = scalar_lea.sflag [#allocation4], %s366
          %s368 = sand.u32 %s147, 1
          %s369 = smul.addr %s368, 8
          %s370 = scalar_lea.vmem [#allocation8], %s369
          %372 = dma.done %s367, 128
        $region64: #{tpu_custom_call.1} parent=59 // pred_fallthru
          _
      $region60: #{tpu_custom_call.1} parent=5 // pred_fallthru
        _
    $region6: #{tpu_custom_call.1} parent=1 // loop_footer
      %s22 = sadd.s32 1, %s18
    $region7: #{tpu_custom_call.1} parent=1 // loop_footer_branch
      %17 = sbr.rel target = $region3
    $region8: #{tpu_custom_call.1} parent=1 // loop_exit
      _
    %373 = vsyncpa [#allocation3], 1
    %s374 = scalar_lea.sflag [#allocation3], 1
    %375 = vsyncpa %s374, 1
    %376 = vsyncpa [#allocation6], 1
    %377 = vsyncpa [#allocation4], 1
    %s378 = scalar_lea.sflag [#allocation4], 1
    %379 = vsyncpa %s378, 1

</llo_original>
